<compile_context>
chip_gen: v6e
topology: v6e:2x2x1
jax: 0.10.0
libtpu: 0.0.40
codegen_flags: <defaults>
</compile_context>

<pallas_src>
import functools

import jax
import jax.numpy as jnp
from jax.experimental import pallas as pl
from jax.experimental.pallas import tpu as pltpu


def _scores(enc_ref, w2h_ref, w1t_ref, v_ref):
    """Shared hot path: returns (enc block, attention scores [Bt, S] in f32)."""
    Bt, S, H = enc_ref.shape
    enc = enc_ref[...]                                            # [Bt, S, H] (mxu dtype)
    # W1 matmul on the flattened (Bt*S, H) slab -> full-height MXU tiles.
    # (S is a multiple of 8 here, so the reshape is layout-free.)
    w1e = jnp.dot(enc.reshape(Bt * S, H), w1t_ref[...],
                  preferred_element_type=jnp.float32).reshape(Bt, S, H)
    u = jnp.tanh(w1e + w2h_ref[...][:, None, :])                  # f32 [Bt, S, H]
    # Score projection as VPU multiply + lane reduction (keeps the MXU free).
    a = jnp.sum(u * v_ref[...], axis=-1)                          # f32 [Bt, S]
    return enc, a


def _policy_kernel(enc_ref, w2h_ref, bias_ref, w1t_ref, v_ref, out_ref, *, C):
    _, a = _scores(enc_ref, w2h_ref, w1t_ref, v_ref)
    logits = C * jnp.tanh(a) + bias_ref[...]                      # [Bt, S] lane-dense
    m = jnp.max(logits, axis=-1, keepdims=True)
    e = jnp.exp(logits - m)
    # TODO(synk): pl.reciprocal(..., approx=True) is a free EUP win when the
    # caller tolerates ~1e-3 relative error; kept exact for tight test tolerance.
    out_ref[...] = e * pl.reciprocal(jnp.sum(e, axis=-1, keepdims=True))


def _glimpse_kernel(enc_ref, w2h_ref, w1t_ref, v_ref, out_ref):
    enc, a = _scores(enc_ref, w2h_ref, w1t_ref, v_ref)
    m = jnp.max(a, axis=-1, keepdims=True)
    e = jnp.exp(a - m)
    att = e * pl.reciprocal(jnp.sum(e, axis=-1, keepdims=True))   # [Bt, S]
    # Small-S path: broadcast-multiply + sublane reduction.  For large S a
    # dot_general contraction over S (single MXU pass) would be preferable.
    out_ref[...] = jnp.sum(att[:, :, None] * enc.astype(jnp.float32), axis=1)


def _pick_block_b(B, S):
    """Batches per grid step: feed the MXU ~512 LHS rows while keeping the
    batch-block legal for the 2-D inputs/outputs (Bt == B or Bt % 8 == 0)."""
    target = max(1, 512 // max(S, 1))
    if B <= target:
        return B
    for bt in range(min(B, target), 0, -1):
        if B % bt == 0 and bt % 8 == 0:
            return bt
    for bt in range(target + 1, B):
        if B % bt == 0 and bt % 8 == 0:
            return bt
    return B


def attention_forward(h0, enc_outputs, mask, params, *, C=10.0, is_glimpse=False,
                      mxu_dtype=jnp.float32, block_b=None):
    B, S, H = enc_outputs.shape

    # Hoisted projection: one tiny [B,H] x [H,H] matmul for the whole batch.
    w2h = (h0.astype(jnp.float32) @ params["W2"].T.astype(jnp.float32)
           + params["b2"].astype(jnp.float32).reshape(1, H))              # [B, H]
    w1t = params["W1"].T.astype(mxu_dtype)                                # [H, H]
    v_row = params["V"].reshape(1, H).astype(jnp.float32)                 # [1, H]
    enc = enc_outputs.astype(mxu_dtype)                                   # [B, S, H]

    Bt = _pick_block_b(B, S) if block_b is None else block_b
    assert B % Bt == 0, "block_b must divide B"
    grid = (B // Bt,)

    # Explicit scoped-VMEM budget (double-buffered tiles + resident weights);
    # matters most on v7x's 64 MiB VMEM.
    itemsize = jnp.dtype(mxu_dtype).itemsize
    est = (2 * Bt * S * H * itemsize + H * H * itemsize
           + 2 * Bt * H * 4 + 2 * Bt * S * 4 + H * 4
           + 2 * Bt * max(S, H) * 4)
    vmem_limit = int(min(96 * 2**20, max(4 * 2**20, 8 * est)))
    cparams = pltpu.CompilerParams(dimension_semantics=("parallel",),
                                   vmem_limit_bytes=vmem_limit)

    enc_spec = pl.BlockSpec((Bt, S, H), lambda i: (i, 0, 0))
    w2h_spec = pl.BlockSpec((Bt, H), lambda i: (i, 0))
    w1t_spec = pl.BlockSpec((H, H), lambda i: (0, 0))
    v_spec = pl.BlockSpec((1, H), lambda i: (0, 0))

    if is_glimpse:
        out = pl.pallas_call(
            _glimpse_kernel,
            out_shape=jax.ShapeDtypeStruct((B, H), jnp.float32),
            grid=grid,
            in_specs=[enc_spec, w2h_spec, w1t_spec, v_spec],
            out_specs=pl.BlockSpec((Bt, H), lambda i: (i, 0)),
            compiler_params=cparams,
        )(enc, w2h, w1t, v_row)
        return out                                                        # [B, H]

    # Lane-dense additive mask bias; identical result to log(mask) softmax
    # (masked probabilities are exactly 0) but NaN-safe for fully-masked rows.
    bias = jnp.where(mask > 0, 0.0, -1e30).astype(jnp.float32)            # [B, S]
    out = pl.pallas_call(
        functools.partial(_policy_kernel, C=C),
        out_shape=jax.ShapeDtypeStruct((B, S), jnp.float32),
        grid=grid,
        in_specs=[enc_spec, w2h_spec,
                  pl.BlockSpec((Bt, S), lambda i: (i, 0)),                # bias
                  w1t_spec, v_spec],
        out_specs=pl.BlockSpec((Bt, S), lambda i: (i, 0)),
        compiler_params=cparams,
    )(enc, w2h, bias, w1t, v_row)
    return out                                                            # [B, S]


def reference_forward(h0, enc_outputs, mask, params, *, C=10.0, is_glimpse=False):
    """Pure-JAX reference mirroring the PyTorch forward exactly."""
    w1e = enc_outputs @ params["W1"].T
    w2h = (h0 @ params["W2"].T + params["b2"])[:, None, :]
    u = jnp.tanh(w1e + w2h)
    a = u @ params["V"]                                   # [B, S, 1]
    if is_glimpse:
        att = jax.nn.softmax(a, axis=1)                   # [B, S, 1]
        return jnp.einsum("bsx,bsh->bh", att, enc_outputs)
    a = C * jnp.tanh(a)[..., 0]                           # [B, S]
    return jax.nn.softmax(a + jnp.log(mask.astype(jnp.float32)), axis=1)


if __name__ == "__main__":
    B, S, H = 2, 8, 32
    C = 10.0

    key = jax.random.PRNGKey(0)
    k_h0, k_enc, k_w1, k_w2, k_b2, k_v = jax.random.split(key, 6)

    # Deterministic parameter init (shapes from Attention.__init__).
    # NOTE: the module inits V to zeros; small random values keep the scores
    # non-trivial while remaining fully deterministic.
    params = {
        "W1": jax.random.normal(k_w1, (H, H), jnp.float32) * 0.1,
        "W2": jax.random.normal(k_w2, (H, H), jnp.float32) * 0.1,
        "b2": jax.random.normal(k_b2, (H,), jnp.float32) * 0.1,
        "V": jax.random.normal(k_v, (H, 1), jnp.float32) * 0.1,
    }

    h0 = jax.random.normal(k_h0, (B, H), jnp.float32)
    enc_outputs = jax.random.normal(k_enc, (B, S, H), jnp.float32)

    # 0/1 mask with at least one valid position per row.
    mask = jnp.ones((B, S), jnp.float32)
    mask = mask.at[0, -2:].set(0.0)
    mask = mask.at[1, 0].set(0.0)

    # ---------- f32 path (tight tolerance) ----------
    policy = attention_forward(h0, enc_outputs, mask, params, C=C, is_glimpse=False)
    policy = jax.block_until_ready(policy)
    policy_ref = reference_forward(h0, enc_outputs, mask, params, C=C, is_glimpse=False)
    assert policy.shape == (B, S)
    assert jnp.allclose(policy, policy_ref, atol=1e-5, rtol=1e-5), "policy mismatch"

    glimpse = attention_forward(h0, enc_outputs, mask, params, C=C, is_glimpse=True)
    glimpse = jax.block_until_ready(glimpse)
    glimpse_ref = reference_forward(h0, enc_outputs, mask, params, C=C, is_glimpse=True)
    assert glimpse.shape == (B, H)
    assert jnp.allclose(glimpse, glimpse_ref, atol=1e-5, rtol=1e-5), "glimpse mismatch"

    # ---------- bf16 MXU-input path (loose tolerance, v6e/v7x fast path) ----------
    policy_bf16 = jax.block_until_ready(
        attention_forward(h0, enc_outputs, mask, params, C=C, is_glimpse=False,
                          mxu_dtype=jnp.bfloat16))
    assert jnp.allclose(policy_bf16, policy_ref, atol=5e-2, rtol=5e-2), \
        "bf16 policy mismatch"

    glimpse_bf16 = jax.block_until_ready(
        attention_forward(h0, enc_outputs, mask, params, C=C, is_glimpse=True,
                          mxu_dtype=jnp.bfloat16))
    assert jnp.allclose(glimpse_bf16, glimpse_ref, atol=5e-2, rtol=5e-2), \
        "bf16 glimpse mismatch"

    print("KERNEL_OK")
</pallas_src>

<mosaic_0001>
module attributes {stable_mosaic.version = 11 : i64} {
  func.func @_policy_kernel(%arg0: i32, %arg1: memref<2x8x32xf32, #tpu.memory_space<vmem>>, %arg2: memref<2x32xf32, #tpu.memory_space<vmem>>, %arg3: memref<2x8xf32, #tpu.memory_space<vmem>>, %arg4: memref<32x32xf32, #tpu.memory_space<vmem>>, %arg5: memref<1x32xf32, #tpu.memory_space<vmem>>, %arg6: memref<2x8xf32, #tpu.memory_space<vmem>>) attributes {dimension_semantics = [#tpu.dimension_semantics<parallel>], iteration_bounds = array<i64: 1>, scalar_prefetch = 0 : i64, scratch_operands = 0 : i64, tpu.core_type = #tpu.core_type<tc>, window_params = [{transform_indices = @transform_0, window_bounds = array<i64: 2, 8, 32>}, {transform_indices = @transform_1, window_bounds = array<i64: 2, 32>}, {transform_indices = @transform_2, window_bounds = array<i64: 2, 8>}, {pipeline_mode = #tpu.pipeline_mode<synchronous>, transform_indices = @transform_3, window_bounds = array<i64: 32, 32>}, {pipeline_mode = #tpu.pipeline_mode<synchronous>, transform_indices = @transform_4, window_bounds = array<i64: 1, 32>}, {transform_indices = @transform_5, window_bounds = array<i64: 2, 8>}]} {
    %c0 = arith.constant 0 : index
    %c0_0 = arith.constant 0 : index
    %c0_1 = arith.constant 0 : index
    %0 = vector.load %arg1[%c0, %c0_0, %c0_1] : memref<2x8x32xf32, #tpu.memory_space<vmem>>, vector<2x8x32xf32>
    %1 = vector.shape_cast %0 : vector<2x8x32xf32> to vector<16x32xf32>
    %c0_2 = arith.constant 0 : index
    %c0_3 = arith.constant 0 : index
    %2 = vector.load %arg4[%c0_2, %c0_3] : memref<32x32xf32, #tpu.memory_space<vmem>>, vector<32x32xf32>
    %cst = arith.constant dense<0.000000e+00> : vector<16x32xf32>
    %3 = tpu.matmul %1, %2, %cst {dimension_numbers = #tpu.dot_dimension_numbers<[1], [0], [0], [1], [0, 0, 1, 1], [], []>} : vector<16x32xf32>, vector<32x32xf32>, vector<16x32xf32> -> vector<16x32xf32>
    %4 = vector.shape_cast %3 : vector<16x32xf32> to vector<2x8x32xf32>
    %c0_4 = arith.constant 0 : index
    %c0_5 = arith.constant 0 : index
    %5 = vector.load %arg2[%c0_4, %c0_5] : memref<2x32xf32, #tpu.memory_space<vmem>>, vector<2x32xf32>
    %6 = vector.shape_cast %5 : vector<2x32xf32> to vector<2x1x32xf32>
    %7 = vector.broadcast %6 : vector<2x1x32xf32> to vector<2x8x32xf32>
    %8 = arith.addf %4, %7 : vector<2x8x32xf32>
    %9 = math.tanh %8 : vector<2x8x32xf32>
    %c0_6 = arith.constant 0 : index
    %c0_7 = arith.constant 0 : index
    %10 = vector.load %arg5[%c0_6, %c0_7] : memref<1x32xf32, #tpu.memory_space<vmem>>, vector<1x32xf32>
    %11 = vector.shape_cast %10 : vector<1x32xf32> to vector<1x1x32xf32>
    %12 = vector.broadcast %11 : vector<1x1x32xf32> to vector<2x8x32xf32>
    %13 = arith.mulf %9, %12 : vector<2x8x32xf32>
    %cst_8 = arith.constant dense<0.000000e+00> : vector<2x8xf32>
    %14 = vector.multi_reduction <add>, %13, %cst_8 [2] : vector<2x8x32xf32> to vector<2x8xf32>
    %15 = math.tanh %14 : vector<2x8xf32>
    %cst_9 = arith.constant 1.000000e+01 : f32
    %16 = vector.broadcast %cst_9 : f32 to vector<2x8xf32>
    %17 = arith.mulf %16, %15 : vector<2x8xf32>
    %c0_10 = arith.constant 0 : index
    %c0_11 = arith.constant 0 : index
    %18 = vector.load %arg3[%c0_10, %c0_11] : memref<2x8xf32, #tpu.memory_space<vmem>>, vector<2x8xf32>
    %19 = arith.addf %17, %18 : vector<2x8xf32>
    %cst_12 = arith.constant dense<0xFF800000> : vector<2xf32>
    %20 = vector.multi_reduction <maximumf>, %19, %cst_12 [1] : vector<2x8xf32> to vector<2xf32>
    %21 = vector.shape_cast %20 : vector<2xf32> to vector<2x1xf32>
    %22 = vector.broadcast %21 : vector<2x1xf32> to vector<2x8xf32>
    %23 = arith.subf %19, %22 : vector<2x8xf32>
    %24 = math.exp %23 : vector<2x8xf32>
    %cst_13 = arith.constant dense<0.000000e+00> : vector<2xf32>
    %25 = vector.multi_reduction <add>, %24, %cst_13 [1] : vector<2x8xf32> to vector<2xf32>
    %26 = vector.shape_cast %25 : vector<2xf32> to vector<2x1xf32>
    %27 = tpu.reciprocal %26 : vector<2x1xf32> -> vector<2x1xf32>
    %28 = vector.broadcast %27 : vector<2x1xf32> to vector<2x8xf32>
    %29 = arith.mulf %24, %28 : vector<2x8xf32>
    %c0_14 = arith.constant 0 : index
    %c0_15 = arith.constant 0 : index
    %30 = vector.load %arg6[%c0_14, %c0_15] : memref<2x8xf32, #tpu.memory_space<vmem>>, vector<2x8xf32>
    tpu.vector_store %arg6[%c0_14, %c0_15], %29 {strides = array<i32>} : memref<2x8xf32, #tpu.memory_space<vmem>>, vector<2x8xf32>,
    return
  }
  func.func @transform_0(%arg0: i32) -> (i32, i32, i32) {
    %c0_i32 = arith.constant 0 : i32
    %c0_i32_0 = arith.constant 0 : i32
    %c0_i32_1 = arith.constant 0 : i32
    return %arg0, %c0_i32, %c0_i32_0 : i32, i32, i32
  }
  func.func @transform_1(%arg0: i32) -> (i32, i32) {
    %c0_i32 = arith.constant 0 : i32
    %c0_i32_0 = arith.constant 0 : i32
    return %arg0, %c0_i32 : i32, i32
  }
  func.func @transform_2(%arg0: i32) -> (i32, i32) {
    %c0_i32 = arith.constant 0 : i32
    %c0_i32_0 = arith.constant 0 : i32
    return %arg0, %c0_i32 : i32, i32
  }
  func.func @transform_3(%arg0: i32) -> (i32, i32) {
    %c0_i32 = arith.constant 0 : i32
    %c0_i32_0 = arith.constant 0 : i32
    %c0_i32_1 = arith.constant 0 : i32
    return %c0_i32, %c0_i32_0 : i32, i32
  }
  func.func @transform_4(%arg0: i32) -> (i32, i32) {
    %c0_i32 = arith.constant 0 : i32
    %c0_i32_0 = arith.constant 0 : i32
    %c0_i32_1 = arith.constant 0 : i32
    return %c0_i32, %c0_i32_0 : i32, i32
  }
  func.func @transform_5(%arg0: i32) -> (i32, i32) {
    %c0_i32 = arith.constant 0 : i32
    %c0_i32_0 = arith.constant 0 : i32
    return %arg0, %c0_i32 : i32, i32
  }
}

</mosaic_0001>

<llo_original>
// kernel: tpu_custom_call.1
$region0: #{tpu_custom_call.1}
  #allocation0 [shape = 'u32[]', space=smem, size = 0x4, offset = 0x4, fixed_abs, tag = 'smem constant byte address 0x4 - core index']
  #allocation1 [shape = 'u32[144,128]{1,0:T(1,128)}', space=vmem, size = 0x12000, scoped, tag = 'internal scratch']
  %s0 = inlined_call_operand.hbm [shape: f32[2,8,32], index: 0, kind: input, shape index: {}]
  %s1 = inlined_call_operand.hbm [shape: f32[2,32], index: 1, kind: input, shape index: {}]
  %s2 = inlined_call_operand.vmem [shape: f32[2,8], index: 2, kind: input, shape index: {}]
  %s3 = inlined_call_operand.hbm [shape: f32[32,32], index: 3, kind: input, shape index: {}]
  %s4 = inlined_call_operand.vmem [shape: f32[1,32], index: 4, kind: input, shape index: {}]
  %s5 = inlined_call_operand.hbm [shape: f32[2,8], index: 5, kind: output, shape index: {}]
  %s6 = sld [smem:[#allocation0]]
  $region42: #{tpu_custom_call.1} parent=0
    _
  %s8 = ssub.s32 1, %s6
  %s9 = scalar_select 0, %s8, %s6
  $region1: #{tpu_custom_call.1} parent=0
    #allocation2 [shape = 'u8[8192]{0}', space=vmem, size = 0x2000, scoped, tag = 'input window, operand 0, single buffered']
    #allocation3 [shape = 's32[1]{0}', space=sflag, size = 0x4, scoped, tag = 'scoped memory for tpu_custom_call.1']
    #allocation4 [shape = 's32[1]{0}', space=sflag, size = 0x4, scoped, tag = 'scoped memory for tpu_custom_call.1']
    #allocation5 [shape = 'u8[1024]{0}', space=vmem, size = 0x400, scoped, tag = 'input window, operand 1, single buffered']
    #allocation6 [shape = 's32[1]{0}', space=sflag, size = 0x4, scoped, tag = 'scoped memory for tpu_custom_call.1']
    #allocation7 [shape = 'u8[16384]{0}', space=vmem, size = 0x4000, scoped, tag = 'input window, operand 3, single buffered']
    #allocation8 [shape = 'u8[1024]{0}', space=vmem, size = 0x400, scoped, tag = 'output window, operand 0, single buffered']
    %10 = vsyncpa [#allocation3], 0
    %11 = vsyncpa [#allocation6], 0
    %12 = vsyncpa [#allocation4], 0
    // Predicated region
    $region2: #{tpu_custom_call.1} parent=1 // pred_check
      _
    $region3: #{tpu_custom_call.1} parent=1 // pred_check_branch
      %14 = sbr.rel (0) target = $region5
    $region4: #{tpu_custom_call.1} parent=1 // pred_region
      %s16 = ssub.s32 256, 256
      %17 = vsyncadd [#allocation3], %s16
      %s18 = sshll.u32 [#allocation2], 4
      %s19 = int_to_ptr.vmem [resolvable:$true] %s18
      %24 = dma.hbm_to_vmem [thread:$0]  %s0, 256, %s19, [#allocation3], 128, 128, 8
    $region5: #{tpu_custom_call.1} parent=1 // pred_fallthru
      _
    // Predicated region
    $region6: #{tpu_custom_call.1} parent=1 // pred_check
      _
    $region7: #{tpu_custom_call.1} parent=1 // pred_check_branch
      %26 = sbr.rel (0) target = $region9
    $region8: #{tpu_custom_call.1} parent=1 // pred_region
      %s28 = ssub.s32 32, 32
      %29 = vsyncadd [#allocation6], %s28
      %s31 = sshll.u32 [#allocation5], 4
      %s32 = int_to_ptr.vmem [resolvable:$true] %s31
      %34 = dma.hbm_to_vmem [thread:$0]  %s1, 32, %s32, [#allocation6]
    $region9: #{tpu_custom_call.1} parent=1 // pred_fallthru
      _
    // Predicated region
    $region10: #{tpu_custom_call.1} parent=1 // pred_check
      _
    $region11: #{tpu_custom_call.1} parent=1 // pred_check_branch
      %36 = sbr.rel (0) target = $region13
    $region12: #{tpu_custom_call.1} parent=1 // pred_region
      _
    $region13: #{tpu_custom_call.1} parent=1 // pred_fallthru
      _
    // Predicated region
    $region14: #{tpu_custom_call.1} parent=1 // pred_check
      _
    $region15: #{tpu_custom_call.1} parent=1 // pred_check_branch
      %38 = sbr.rel (0) target = $region17
    $region16: #{tpu_custom_call.1} parent=1 // pred_region
      %s40 = ssub.s32 512, 512
      %41 = vsyncadd [#allocation6], %s40
      %s42 = sshll.u32 [#allocation7], 4
      %s43 = int_to_ptr.vmem [resolvable:$true] %s42
      %48 = dma.hbm_to_vmem [thread:$0]  %s3, 512, %s43, [#allocation6], 128, 128, 8
    $region17: #{tpu_custom_call.1} parent=1 // pred_fallthru
      _
    // Predicated region
    $region18: #{tpu_custom_call.1} parent=1 // pred_check
      _
    $region19: #{tpu_custom_call.1} parent=1 // pred_check_branch
      %50 = sbr.rel (0) target = $region21
    $region20: #{tpu_custom_call.1} parent=1 // pred_region
      _
    $region21: #{tpu_custom_call.1} parent=1 // pred_fallthru
      _
    // Predicated region
    $region22: #{tpu_custom_call.1} parent=1 // pred_check
      _
    $region23: #{tpu_custom_call.1} parent=1 // pred_check_branch
      %52 = sbr.rel (0) target = $region25
    $region24: #{tpu_custom_call.1} parent=1 // pred_region
      %53 = dma.done [#allocation3], 256
    $region25: #{tpu_custom_call.1} parent=1 // pred_fallthru
      _
    // Predicated region
    $region26: #{tpu_custom_call.1} parent=1 // pred_check
      _
    $region27: #{tpu_custom_call.1} parent=1 // pred_check_branch
      %55 = sbr.rel (0) target = $region29
    $region28: #{tpu_custom_call.1} parent=1 // pred_region
      %56 = dma.done [#allocation6], 32
    $region29: #{tpu_custom_call.1} parent=1 // pred_fallthru
      _
    // Predicated region
    $region30: #{tpu_custom_call.1} parent=1 // pred_check
      _
    $region31: #{tpu_custom_call.1} parent=1 // pred_check_branch
      %58 = sbr.rel (0) target = $region33
    $region32: #{tpu_custom_call.1} parent=1 // pred_region
      %59 = dma.done [#allocation6], 512
    $region33: #{tpu_custom_call.1} parent=1 // pred_fallthru
      _
    %v60 = vld [vmem:[#allocation2] sm:$0xff]
    %v61 = vld [vmem:[#allocation2 + $0x8] sm:$0xff]
    %v62 = vld [vmem:[#allocation7] sm:$0xff]
    %v63 = vld [vmem:[#allocation7 + $0x8] sm:$0xff]
    %v64 = vld [vmem:[#allocation7 + $0x10] sm:$0xff]
    %v65 = vld [vmem:[#allocation7 + $0x18] sm:$0xff]
    %vm66 = vcmask 261120
    %v68 = vsel %vm66, %v60, 0
    %v71 = vsel %vm66, %v61, 0
    %73 = vmatprep.subr.mxu0 0.0
    %74 = vmatpush1.msra.mxu0 0.0
    %75 = vmatprep.subr.mxu0 0.0
    %76 = vmatpush1.msra.mxu0 0.0
    %77 = vmatprep.subr.mxu0 0.0
    %78 = vmatpush1.msra.mxu0 0.0
    %79 = vmatprep.subr.mxu0 0.0
    %80 = vmatpush1.msra.mxu0 0.0
    %81 = vmatprep.subr.mxu0 0.0
    %82 = vmatpush1.msra.mxu0 0.0
    %83 = vmatprep.subr.mxu0 0.0
    %84 = vmatpush1.msra.mxu0 0.0
    %85 = vmatprep.subr.mxu0 0.0
    %86 = vmatpush1.msra.mxu0 0.0
    %87 = vmatprep.subr.mxu0 0.0
    %88 = vmatpush1.msra.mxu0 0.0
    %89 = vmatprep.subr.mxu0 0.0
    %90 = vmatpush1.msra.mxu0 0.0
    %91 = vmatprep.subr.mxu0 0.0
    %92 = vmatpush1.msra.mxu0 0.0
    %93 = vmatprep.subr.mxu0 0.0
    %94 = vmatpush1.msra.mxu0 0.0
    %95 = vmatprep.subr.mxu0 0.0
    %96 = vmatpush1.msra.mxu0 0.0
    %97 = vmatprep.subr.mxu0 0.0
    %98 = vmatpush1.msra.mxu0 %v65
    %99 = vmatprep.subr.mxu0 0.0
    %100 = vmatpush1.msra.mxu0 %v64
    %101 = vmatprep.subr.mxu0 0.0
    %102 = vmatpush1.msra.mxu0 %v63
    %103 = vmatprep.subr.mxu0 0.0
    %104 = vmatpush1.msra.mxu0 %v62
    %105 = vmatprep.subr.mxu0 0.0
    %106 = vmatpush2.msra.mxu0 0.0
    %107 = vmatprep.subr.mxu0 0.0
    %108 = vmatpush2.msra.mxu0 0.0
    %109 = vmatprep.subr.mxu0 0.0
    %110 = vmatpush2.msra.mxu0 0.0
    %111 = vmatprep.subr.mxu0 0.0
    %112 = vmatpush2.msra.mxu0 0.0
    %113 = vmatprep.subr.mxu0 0.0
    %114 = vmatpush2.msra.mxu0 0.0
    %115 = vmatprep.subr.mxu0 0.0
    %116 = vmatpush2.msra.mxu0 0.0
    %117 = vmatprep.subr.mxu0 0.0
    %118 = vmatpush2.msra.mxu0 0.0
    %119 = vmatprep.subr.mxu0 0.0
    %120 = vmatpush2.msra.mxu0 0.0
    %121 = vmatprep.subr.mxu0 0.0
    %122 = vmatpush2.msra.mxu0 0.0
    %123 = vmatprep.subr.mxu0 0.0
    %124 = vmatpush2.msra.mxu0 0.0
    %125 = vmatprep.subr.mxu0 0.0
    %126 = vmatpush2.msra.mxu0 0.0
    %127 = vmatprep.subr.mxu0 0.0
    %128 = vmatpush2.msra.mxu0 0.0
    %129 = vmatprep.subr.mxu0 0.0
    %130 = vmatpush2.msra.mxu0 0.0
    %131 = vmatprep.subr.mxu0 0.0
    %132 = vmatpush2.msra.mxu0 0.0
    %133 = vmatprep.subr.mxu0 0.0
    %134 = vmatpush2.msra.mxu0 0.0
    %135 = vmatprep.subr.mxu0 0.0
    %136 = vmatpush2.msra.mxu0 0.0
    %137 = vmatprep.mubr.f32.mxu0 0.0
    %138 = vmatmul.mubr.f32.gmra.mxu0 %v68
    %v139 = vpop.f32.mrf.mxu0
    %v140 = vadd.f32 0.0, %v139
    %v141 = vpop.f32.mrf.mxu0
    %142 = vmatprep.mubr.f32.mxu0 0.0
    %143 = vmatmul.mubr.f32.gmra.mxu0 %v71
    %v144 = vpop.f32.mrf.mxu0
    %v145 = vadd.f32 0.0, %v144
    %v146 = vpop.f32.mrf.mxu0
    %147 = vdwg.mxu0
    %v148 = vld [vmem:[#allocation5] sm:$0x3]
    %v151 = vunpack.c.l.s4 1966171168
    %v152 = vunpack.c.0.s8 %v151
    %v153 = vlaneseq
    %v154 = vshrl.u32 %v153, 7
    %v155 = vsub.s32 %v152, %v154
    %v156 = vrot.slane %v148, %v155
    %v157 = vcombine.high %v156, %v156
    %v159 = vunpack.c.l.s4 1966171168
    %v160 = vunpack.c.0.s8 %v159
    %v161 = vlaneseq
    %v162 = vshrl.u32 %v161, 7
    %v163 = vsub.s32 %v160, %v162
    %v164 = vrot.slane %v156, %v163
    %v166 = vunpack.c.l.s4 1966171168
    %v167 = vunpack.c.0.s8 %v166
    %v168 = vlaneseq
    %v169 = vshrl.u32 %v168, 7
    %v170 = vsub.s32 %v167, %v169
    %v171 = vrot.slane %v157, %v170
    %v172 = vlaneseq
    %v173 = vshrl.u32 %v172, 7
    %v174 = vsub.s32 0, %v173
    %v175 = vrot.slane %v164, %v174
    %v176 = vlaneseq
    %v177 = vshrl.u32 %v176, 7
    %v178 = vsub.s32 0, %v177
    %v179 = vrot.slane %v171, %v178
    %v182 = vadd.f32 %v140, %v175
    %v183 = vadd.f32 %v145, %v179
    %v184 = vtanh.pop %v182
    %v185 = vtanh.pop %v183
    %v186 = vld [vmem:[%s4] sm:$0x1]
    %v188 = vlaneseq
    %v189 = vshrl.u32 %v188, 7
    %v190 = vsub.s32 0, %v189
    %v191 = vrot.slane %v186, %v190
    %v193 = vmul.f32 %v184, %v191
    %v194 = vmul.f32 %v185, %v191
    %v195 = vsel %vm66, %v193, 0.0
    %196 = vadd.xlane.f32.xlu0 %v195
    %v197 = vpop.xlane.xlu0 %196
    %v198 = vsel %vm66, %v194, 0.0
    %199 = vadd.xlane.f32.xlu0 %v198
    %v200 = vpop.xlane.xlu0 %199
    %v201 = vtanh.pop %v197
    %v202 = vtanh.pop %v200
    %v203 = vmul.f32 %v201, 10.0
    %v204 = vmul.f32 %v202, 10.0
    %v205 = vld [vmem:[%s2] sm:$0x3]
    %v207 = vlaneseq
    %v208 = vshrl.u32 %v207, 7
    %v209 = vsub.s32 0, %v208
    %v210 = vrot.slane %v205, %v209
    %212 = vbcast.lane.b32.xlu0 %v210, 256
    %v213 = vpop.permute.xlu0 %212
    %v214 = vlaneseq
    %v215 = vshrl.u32 %v214, 7
    %v216 = vsub.s32 1, %v215
    %v217 = vrot.slane %v205, %v216
    %219 = vbcast.lane.b32.xlu0 %v217, 256
    %v220 = vpop.permute.xlu0 %219
    %v223 = vadd.f32 %v203, %v213
    %v224 = vadd.f32 %v204, %v220
    %227 = vset.pattern.permute.xlu0 0
    %228 = vperm.xlu0 %227, %v223
    %v229 = vpop.permute.xlu0 %228
    %230 = vset.pattern.permute.xlu0 0
    %231 = vperm.xlu0 %230, %v224
    %v232 = vpop.permute.xlu0 %231
    %v233 = vlaneseq
    %v234 = vand.u32 %v233, 127
    %v235 = vlaneseq
    %v236 = vshrl.u32 %v235, 7
    %v237 = vsub.s32 %v234, %v236
    %v238 = vrot.slane %v229, %v237
    %v239 = vlaneseq
    %v240 = vshrl.u32 %v239, 7
    %v241 = vsub.s32 %v234, %v240
    %v242 = vrot.slane %v232, %v241
    %vm243 = vcmask 1041409
    %v244 = vsel %vm243, %v242, %v238
    %vm246 = vcmask 58368
    %v247 = vsel %vm246, %v244, -inf
    %248 = vmax.xlane.f32.xlu0 %v247
    %v249 = vpop.xlane.xlu0 %248
    %v251 = vlaneseq
    %v252 = vshrl.u32 %v251, 7
    %v253 = vsub.s32 0, %v252
    %v254 = vrot.slane %v249, %v253
    %v255 = vlaneseq
    %v256 = vshrl.u32 %v255, 7
    %v257 = vsub.s32 1, %v256
    %v258 = vrot.slane %v249, %v257
    %v261 = vsub.f32 %v223, %v254
    %v262 = vsub.f32 %v224, %v258
    %v263 = vmul.f32 %v261, 1.442695
    %v264 = vpow.pop %v263
    %v265 = vmul.f32 %v262, 1.442695
    %v266 = vpow.pop %v265
    %269 = vset.pattern.permute.xlu0 0
    %270 = vperm.xlu0 %269, %v264
    %v271 = vpop.permute.xlu0 %270
    %272 = vset.pattern.permute.xlu0 0
    %273 = vperm.xlu0 %272, %v266
    %v274 = vpop.permute.xlu0 %273
    %v275 = vlaneseq
    %v276 = vshrl.u32 %v275, 7
    %v277 = vsub.s32 %v234, %v276
    %v278 = vrot.slane %v271, %v277
    %v279 = vlaneseq
    %v280 = vshrl.u32 %v279, 7
    %v281 = vsub.s32 %v234, %v280
    %v282 = vrot.slane %v274, %v281
    %v283 = vsel %vm243, %v282, %v278
    %v285 = vsel %vm246, %v283, 0.0
    %286 = vadd.xlane.f32.xlu0 %v285
    %v287 = vpop.xlane.xlu0 %286
    %v288 = vrcp.pop %v287
    %v290 = vlaneseq
    %v291 = vshrl.u32 %v290, 7
    %v292 = vsub.s32 0, %v291
    %v293 = vrot.slane %v288, %v292
    %v294 = vlaneseq
    %v295 = vshrl.u32 %v294, 7
    %v296 = vsub.s32 1, %v295
    %v297 = vrot.slane %v288, %v296
    %v300 = vmul.f32 %v264, %v293
    %v301 = vmul.f32 %v266, %v297
    %304 = vset.pattern.permute.xlu0 0
    %305 = vperm.xlu0 %304, %v300
    %v306 = vpop.permute.xlu0 %305
    %307 = vset.pattern.permute.xlu0 0
    %308 = vperm.xlu0 %307, %v301
    %v309 = vpop.permute.xlu0 %308
    %v310 = vlaneseq
    %v311 = vshrl.u32 %v310, 7
    %v312 = vsub.s32 %v234, %v311
    %v313 = vrot.slane %v306, %v312
    %v314 = vlaneseq
    %v315 = vshrl.u32 %v314, 7
    %v316 = vsub.s32 %v234, %v315
    %v317 = vrot.slane %v309, %v316
    %v318 = vsel %vm243, %v317, %v313
    %320 = vst.msk [vmem:[#allocation8] sm:$0x3] %vm246, %v318
    // Predicated region
    $region34: #{tpu_custom_call.1} parent=1 // pred_check
      _
    $region35: #{tpu_custom_call.1} parent=1 // pred_check_branch
      %322 = sbr.rel (0) target = $region37
    $region36: #{tpu_custom_call.1} parent=1 // pred_region
      %s324 = ssub.s32 32, 32
      %325 = vsyncadd [#allocation4], %s324
      %s327 = sshll.u32 [#allocation8], 4
      %s328 = int_to_ptr.vmem [resolvable:$true] %s327
      %330 = dma.vmem_to_hbm [thread:$0]  %s328, 32, %s5, [#allocation4]
    $region37: #{tpu_custom_call.1} parent=1 // pred_fallthru
      _
    // Predicated region
    $region38: #{tpu_custom_call.1} parent=1 // pred_check
      _
    $region39: #{tpu_custom_call.1} parent=1 // pred_check_branch
      %332 = sbr.rel (0) target = $region41
    $region40: #{tpu_custom_call.1} parent=1 // pred_region
      %333 = dma.done [#allocation4], 32
    $region41: #{tpu_custom_call.1} parent=1 // pred_fallthru
      _
    %334 = vsyncpa [#allocation3], 1
    %335 = vsyncpa [#allocation6], 1
    %336 = vsyncpa [#allocation4], 1

</llo_original>
